<compile_context>
chip_gen: v5e
topology: v5e:2x2
jax: 0.10.0
libtpu: 0.0.40
codegen_flags: <defaults>
</compile_context>

<pallas_src>
import jax
import jax.numpy as jnp
from jax.experimental import pallas as pl
from jax.experimental.pallas import tpu as pltpu


# ----------------------------------------------------------------------------
# Generation-aware sizing
# ----------------------------------------------------------------------------
def _tpu_targets():
    """(per-step activation byte target, vmem_limit_bytes) per TPU generation."""
    try:
        kind = jax.devices()[0].device_kind.lower()
    except Exception:
        kind = ""
    if any(tag in kind for tag in ("v2", "v3", "v4", "v5", "v6")):
        # 128 MiB physical VMEM: big tiles amortize per-step overhead.
        return 14 * 1024 * 1024, 96 * 1024 * 1024
    # v7x / unknown: 64 MiB physical VMEM, leave headroom for double buffering.
    return 7 * 1024 * 1024, 48 * 1024 * 1024


def _pick_lane_tile(S, c_total, n_batch, target_bytes):
    """Lane-tile TS: largest multiple of 128 dividing S within the byte budget.

    Budget is exact (no hidden lane padding) because TS is a lane multiple and
    the channel dims are already sublane-aligned.  Falls back to TS = S for
    spatial sizes that are not a multiple of 128 (small maps).
    """
    bytes_per_lane = (c_total + 1) * 4            # f32 upper bound per lane/step
    budget_lanes = max(128, target_bytes // bytes_per_lane)

    if S % 128 == 0:
        ts = min(S, (budget_lanes // 128) * 128)
        while ts >= 128 and S % ts != 0:
            ts -= 128
        if ts < 128:
            ts = 128                              # 128 divides S here
    else:
        # TODO(synk): odd spatial sizes take the whole flattened row per step;
        # acceptable for the small maps this happens at.
        ts = S

    # Feed both v7x TensorCores: want at least 2 grid steps overall.
    if n_batch * (S // ts) < 2:
        for div in (2, 4, 8):
            if S % div == 0 and (S // div) % 128 == 0:
                ts = S // div
                break
    return ts


# ----------------------------------------------------------------------------
# Kernel
# ----------------------------------------------------------------------------
def _fuse1x1_kernel(x1_ref, x2_ref, w1_ref, w2_ref, b_ref, o_ref):
    """Fused channel-concat + 1x1 conv (Cout=1) over one (batch, lane-block) tile.

    x1_ref: (1, C1, TS) VMEM   img_features tile  (flattened spatial on lanes)
    x2_ref: (1, C2, TS) VMEM   res_features tile
    w1_ref: (1, C1)     VMEM   conv weight, img half
    w2_ref: (1, C2)     VMEM   conv weight, res half
    b_ref : (1,)        SMEM   conv bias
    o_ref : (1, 1, TS)  VMEM   lane-dense output tile of (N, 1, S)
    """
    acc = jnp.dot(w1_ref[...], x1_ref[0], preferred_element_type=jnp.float32)
    acc = acc + jnp.dot(w2_ref[...], x2_ref[0], preferred_element_type=jnp.float32)
    o_ref[0] = (acc + b_ref[0]).astype(o_ref.dtype)


# ----------------------------------------------------------------------------
# Wrapper
# ----------------------------------------------------------------------------
def fuse_conv1x1(img_features, res_features, w, b):
    """ConvNeXtFuse mode-1/2 head: cat(dim=channel) + Conv2d(C1+C2, 1, kernel=1).

    img_features: (N, C1, H, W);  res_features: (N, C2, H, W)
    w: (C1 + C2,) f32   (1x1-conv weight with the size-1 out-channel squeezed)
    b: (1,) f32
    returns: (N, 1, H, W) in img_features.dtype
    """
    N, C1, H, W = img_features.shape
    N2, C2, H2, W2 = res_features.shape
    assert (N, H, W) == (N2, H2, W2), "feature maps must share batch/spatial dims"
    assert w.shape == (C1 + C2,) and b.shape == (1,)

    S = H * W
    target_bytes, vmem_limit = _tpu_targets()
    ts = _pick_lane_tile(S, C1 + C2, N, target_bytes)
    grid = (N, S // ts)

    x1 = img_features.reshape(N, C1, S)           # free: contiguous NCHW
    x2 = res_features.reshape(N, C2, S)
    w1 = w[:C1].reshape(1, C1).astype(img_features.dtype)
    w2 = w[C1:].reshape(1, C2).astype(res_features.dtype)
    b32 = b.astype(jnp.float32)

    out = pl.pallas_call(
        _fuse1x1_kernel,
        out_shape=jax.ShapeDtypeStruct((N, 1, S), img_features.dtype),
        grid=grid,
        in_specs=[
            pl.BlockSpec((1, C1, ts), lambda n, s: (n, 0, s)),
            pl.BlockSpec((1, C2, ts), lambda n, s: (n, 0, s)),
            pl.BlockSpec((1, C1), lambda n, s: (0, 0)),
            pl.BlockSpec((1, C2), lambda n, s: (0, 0)),
            pl.BlockSpec(memory_space=pltpu.MemorySpace.SMEM),
        ],
        out_specs=pl.BlockSpec((1, 1, ts), lambda n, s: (n, 0, s)),
        compiler_params=pltpu.CompilerParams(
            dimension_semantics=("parallel", "parallel"),
            vmem_limit_bytes=vmem_limit),
    )(x1, x2, w1, w2, b32)

    return out.reshape(N, 1, H, W)


# ----------------------------------------------------------------------------
# ConvNeXtFuse parameters & forward
# ----------------------------------------------------------------------------
def init_convnext_fuse_params(key, mode=1, in_channels=256, conv_std=0.02):
    """Mirrors ConvNeXtFuse.__init__ + _initialize_weights(conv_std=0.02), mode 1/2."""
    if mode not in (1, 2):
        # TODO(synk): modes 3-9 use a custom Conv2d(PReLU)/LayerNorm head whose
        # Conv2d wrapper class is not part of the provided spec; only the default
        # mode-1/2 fuse_layer (Conv2d(256, 1, kernel_size=1)) is implemented.
        raise NotImplementedError("only ConvNeXtFuse modes 1/2 are implemented")
    w = jax.random.normal(key, (in_channels,), jnp.float32) * conv_std  # N(0, 0.02)
    b = jnp.zeros((1,), jnp.float32)                                    # bias = 0
    return {"mode": mode, "fuse_w": w, "fuse_b": b}


def convnext_fuse_forward(params, img_features, res_features):
    """ConvNeXtFuse.forward for mode 1/2: 1x1 conv over the channel concat."""
    return fuse_conv1x1(img_features, res_features,
                        params["fuse_w"], params["fuse_b"])


# ----------------------------------------------------------------------------
if __name__ == "__main__":
    key = jax.random.PRNGKey(0)
    k_img, k_res, k_par = jax.random.split(key, 3)

    # ConvNeXtFuse mode=1 requires 256 concatenated channels; split 128 / 128.
    N, C1, C2, H, W = 2, 128, 128, 16, 16
    img = jax.random.normal(k_img, (N, C1, H, W), jnp.float32)
    res = jax.random.normal(k_res, (N, C2, H, W), jnp.float32)

    params = init_convnext_fuse_params(k_par, mode=1, in_channels=C1 + C2)

    fwd = jax.jit(lambda a, b: convnext_fuse_forward(params, a, b))
    out = fwd(img, res)
    jax.block_until_ready(out)
    assert out.shape == (N, 1, H, W), out.shape

    # Pure-JAX reference for numerical sanity.
    cat = jnp.concatenate([img, res], axis=1)
    ref = jnp.einsum("nchw,c->nhw", cat, params["fuse_w"]) + params["fuse_b"][0]
    ref = ref[:, None, :, :]
    err = float(jnp.max(jnp.abs(out - ref)))
    assert err < 1e-3, f"max abs error vs reference: {err}"

    print("KERNEL_OK")
</pallas_src>

<mosaic_0001>
module attributes {stable_mosaic.version = 11 : i64} {
  func.func @_fuse1x1_kernel(%arg0: i32, %arg1: i32, %arg2: memref<1x128x256xf32, #tpu.memory_space<vmem>>, %arg3: memref<1x128x256xf32, #tpu.memory_space<vmem>>, %arg4: memref<1x128xf32, #tpu.memory_space<vmem>>, %arg5: memref<1x128xf32, #tpu.memory_space<vmem>>, %arg6: memref<1xf32, #tpu.memory_space<smem>>, %arg7: memref<1x1x256xf32, #tpu.memory_space<vmem>>) attributes {dimension_semantics = [#tpu.dimension_semantics<parallel>, #tpu.dimension_semantics<parallel>], iteration_bounds = array<i64: 2, 1>, scalar_prefetch = 0 : i64, scratch_operands = 0 : i64, tpu.core_type = #tpu.core_type<tc>, window_params = [{transform_indices = @transform_0, window_bounds = array<i64: 1, 128, 256>}, {transform_indices = @transform_1, window_bounds = array<i64: 1, 128, 256>}, {pipeline_mode = #tpu.pipeline_mode<synchronous>, transform_indices = @transform_2, window_bounds = array<i64: 1, 128>}, {pipeline_mode = #tpu.pipeline_mode<synchronous>, transform_indices = @transform_3, window_bounds = array<i64: 1, 128>}, {transform_indices = @transform_4, window_bounds = array<i64: 1>}, {transform_indices = @transform_5, window_bounds = array<i64: 1, 1, 256>}]} {
    %c0 = arith.constant 0 : index
    %c0_0 = arith.constant 0 : index
    %0 = vector.load %arg4[%c0, %c0_0] : memref<1x128xf32, #tpu.memory_space<vmem>>, vector<1x128xf32>
    %c0_1 = arith.constant 0 : index
    %c0_2 = arith.constant 0 : index
    %c0_3 = arith.constant 0 : index
    %1 = vector.load %arg2[%c0_1, %c0_2, %c0_3] : memref<1x128x256xf32, #tpu.memory_space<vmem>>, vector<1x128x256xf32>
    %2 = vector.shape_cast %1 : vector<1x128x256xf32> to vector<128x256xf32>
    %cst = arith.constant dense<0.000000e+00> : vector<1x256xf32>
    %3 = tpu.matmul %0, %2, %cst {dimension_numbers = #tpu.dot_dimension_numbers<[1], [0], [0], [1], [0, 0, 1, 1], [], []>} : vector<1x128xf32>, vector<128x256xf32>, vector<1x256xf32> -> vector<1x256xf32>
    %c0_4 = arith.constant 0 : index
    %c0_5 = arith.constant 0 : index
    %4 = vector.load %arg5[%c0_4, %c0_5] : memref<1x128xf32, #tpu.memory_space<vmem>>, vector<1x128xf32>
    %c0_6 = arith.constant 0 : index
    %c0_7 = arith.constant 0 : index
    %c0_8 = arith.constant 0 : index
    %5 = vector.load %arg3[%c0_6, %c0_7, %c0_8] : memref<1x128x256xf32, #tpu.memory_space<vmem>>, vector<1x128x256xf32>
    %6 = vector.shape_cast %5 : vector<1x128x256xf32> to vector<128x256xf32>
    %cst_9 = arith.constant dense<0.000000e+00> : vector<1x256xf32>
    %7 = tpu.matmul %4, %6, %cst_9 {dimension_numbers = #tpu.dot_dimension_numbers<[1], [0], [0], [1], [0, 0, 1, 1], [], []>} : vector<1x128xf32>, vector<128x256xf32>, vector<1x256xf32> -> vector<1x256xf32>
    %8 = arith.addf %3, %7 : vector<1x256xf32>
    %c0_10 = arith.constant 0 : index
    %9 = memref.load %arg6[%c0_10] : memref<1xf32, #tpu.memory_space<smem>>
    %10 = vector.broadcast %9 : f32 to vector<1x256xf32>
    %11 = arith.addf %8, %10 : vector<1x256xf32>
    %c0_11 = arith.constant 0 : index
    %c0_12 = arith.constant 0 : index
    %c0_13 = arith.constant 0 : index
    %12 = vector.load %arg7[%c0_11, %c0_12, %c0_13] : memref<1x1x256xf32, #tpu.memory_space<vmem>>, vector<1x1x256xf32>
    %13 = vector.shape_cast %12 : vector<1x1x256xf32> to vector<1x256xf32>
    %14 = vector.shape_cast %11 : vector<1x256xf32> to vector<1x1x256xf32>
    tpu.vector_store %arg7[%c0_11, %c0_12, %c0_13], %14 {strides = array<i32>} : memref<1x1x256xf32, #tpu.memory_space<vmem>>, vector<1x1x256xf32>,
    return
  }
  func.func @transform_0(%arg0: i32, %arg1: i32) -> (i32, i32, i32) {
    %c0_i32 = arith.constant 0 : i32
    %c0_i32_0 = arith.constant 0 : i32
    return %arg0, %c0_i32, %arg1 : i32, i32, i32
  }
  func.func @transform_1(%arg0: i32, %arg1: i32) -> (i32, i32, i32) {
    %c0_i32 = arith.constant 0 : i32
    %c0_i32_0 = arith.constant 0 : i32
    return %arg0, %c0_i32, %arg1 : i32, i32, i32
  }
  func.func @transform_2(%arg0: i32, %arg1: i32) -> (i32, i32) {
    %c0_i32 = arith.constant 0 : i32
    %c0_i32_0 = arith.constant 0 : i32
    %c0_i32_1 = arith.constant 0 : i32
    return %c0_i32, %c0_i32_0 : i32, i32
  }
  func.func @transform_3(%arg0: i32, %arg1: i32) -> (i32, i32) {
    %c0_i32 = arith.constant 0 : i32
    %c0_i32_0 = arith.constant 0 : i32
    %c0_i32_1 = arith.constant 0 : i32
    return %c0_i32, %c0_i32_0 : i32, i32
  }
  func.func @transform_4(%arg0: i32, %arg1: i32) -> i32 {
    %c0_i32 = arith.constant 0 : i32
    %c0_i32_0 = arith.constant 0 : i32
    return %c0_i32 : i32
  }
  func.func @transform_5(%arg0: i32, %arg1: i32) -> (i32, i32, i32) {
    %c0_i32 = arith.constant 0 : i32
    %c0_i32_0 = arith.constant 0 : i32
    return %arg0, %c0_i32, %arg1 : i32, i32, i32
  }
}

</mosaic_0001>

<llo_original>
// kernel: _lambda_.1
$region0: #{_lambda_.1}
  #allocation0 [shape = 'u32[]', space=smem, size = 0x4, offset = 0x4, fixed_abs, tag = 'smem constant byte address 0x4 - core index']
  #allocation1 [shape = 'u32[72,128]{1,0:T(1,128)}', space=vmem, size = 0x9000, scoped, tag = 'internal scratch']
  #allocation2 [shape = 'f32[1]{0:T(128)S(6)}', space=smem, size = 0x200, scoped, tag = 'scoped memory for _lambda_.1']
  %s0 = inlined_call_operand.vmem [shape: f32[2,128,256], index: 0, kind: input, shape index: {}]
  %s1 = inlined_call_operand.vmem [shape: f32[2,128,256], index: 1, kind: input, shape index: {}]
  %s2 = inlined_call_operand.vmem [shape: f32[1,128], index: 2, kind: input, shape index: {}]
  %s3 = inlined_call_operand.vmem [shape: f32[1,128], index: 3, kind: input, shape index: {}]
  %s4 = inlined_call_operand.<no memory space> [shape: f32[1], index: 4, kind: input, shape index: {}]
  %s5 = inlined_call_operand.vmem [shape: f32[2,1,256], index: 5, kind: output, shape index: {}]
  %s6 = sld [smem:[#allocation0]]
  $region53: #{_lambda_.1} parent=0
    _
  %s8 = ssub.s32 1, %s6
  %s9 = scalar_select 0, %s8, %s6
  %10 = sst [smem:[#allocation2]] %s4
  loop: start=0, step=1, limit=4
  $region2: #{_lambda_.1} parent=0 // loop_pre_header
    _
  $region3: #{_lambda_.1} parent=0 // loop_header
    %s12 = sphi 0, %s16
    %p13 = scmp.ge.s32.totalorder %s12, 4
    %s19 = sphi 0, %s31
    %s20 = sphi 0, %s27
    %s21 = sphi 0, %s19
    %s22 = sphi 0, %s20
    %s23 = sphi 0, %s21
    %s24 = sphi 0, %s22
    %s36 = sphi 0, %s38
    %s39 = sphi 0, %s36
    %s40 = sphi 0, %s39
    %s56 = sphi 0, %s40
    %s64 = sphi 0, %s66
    %s67 = sphi 0, %s64
    %s68 = sphi 0, %s67
    %s84 = sphi 0, %s68
    %s88 = sphi 0, %s88
    %s90 = sphi 0, %s88
    %s91 = sphi 0, %s90
    %s105 = sphi 0, %s91
    %s109 = sphi 0, %s109
    %s111 = sphi 0, %s109
    %s112 = sphi 0, %s111
    %s126 = sphi 0, %s112
    %s130 = sphi 0, %s130
    %s132 = sphi 0, %s130
    %s133 = sphi 0, %s132
    %s147 = sphi 0, %s133
    %s155 = sphi 0, %s157
    %s158 = sphi 0, %s155
    %s159 = sphi 0, %s158
    %s175 = sphi 0, %s159
  $region4: #{_lambda_.1} parent=0 // loop_header_branch
    %15 = sbr.rel (%p13) target = $region8
  $region5: #{_lambda_.1} parent=0 // loop_body
    %s17 = ssub.s32 %s12, 1
    %s18 = ssub.s32 %s12, 2
    %s25 = sadd.s32 1, %s20
    %p26 = scmp.ge.s32.totalorder %s25, 1
    %s27 = scalar_select %p26, 0, %s25
    %s28 = sadd.s32 1, %s19
    %s29 = scalar_select %p26, %s28, %s19
    %p30 = scmp.ge.s32.totalorder %s29, 2
    %s31 = scalar_select %p30, 0, %s29
    %s32 = ssub.s32 %s19, %s31
    %s33 = ssub.s32 %s20, %s27
    %s34 = sor.u32 %s32, %s33
    %p35 = scmp.eq.s32.totalorder %s34, 0
    %s37 = sadd.s32 %s36, 1
    %s38 = scalar_select %p35, %s36, %s37
    %p41 = pneg %p35
    %p42 = scmp.eq.s32.totalorder %s12, 1
    %p43 = por %p41, %p42
    %p44 = scmp.ne.s32.totalorder %s36, %s39
    %p45 = scmp.eq.s32.totalorder %s12, 0
    %p46 = por %p44, %p45
    %p47 = scmp.ne.s32.totalorder %s36, %s39
    %p48 = scmp.eq.s32.totalorder %s17, 1
    %p49 = por %p47, %p48
    %p50 = scmp.ne.s32.totalorder %s39, %s40
    %p51 = scmp.eq.s32.totalorder %s17, 0
    %p52 = por %p50, %p51
    %p53 = scmp.ne.s32.totalorder %s39, %s40
    %p54 = scmp.eq.s32.totalorder %s18, 1
    %p55 = por %p53, %p54
    %p57 = scmp.ne.s32.totalorder %s40, %s56
    %p58 = scmp.eq.s32.totalorder %s18, 0
    %p59 = por %p57, %p58
    %s60 = ssub.s32 %s19, %s31
    %s61 = ssub.s32 %s20, %s27
    %s62 = sor.u32 %s60, %s61
    %p63 = scmp.eq.s32.totalorder %s62, 0
    %s65 = sadd.s32 %s64, 1
    %s66 = scalar_select %p63, %s64, %s65
    %p69 = pneg %p63
    %p70 = scmp.eq.s32.totalorder %s12, 1
    %p71 = por %p69, %p70
    %p72 = scmp.ne.s32.totalorder %s64, %s67
    %p73 = scmp.eq.s32.totalorder %s12, 0
    %p74 = por %p72, %p73
    %p75 = scmp.ne.s32.totalorder %s64, %s67
    %p76 = scmp.eq.s32.totalorder %s17, 1
    %p77 = por %p75, %p76
    %p78 = scmp.ne.s32.totalorder %s67, %s68
    %p79 = scmp.eq.s32.totalorder %s17, 0
    %p80 = por %p78, %p79
    %p81 = scmp.ne.s32.totalorder %s67, %s68
    %p82 = scmp.eq.s32.totalorder %s18, 1
    %p83 = por %p81, %p82
    %p85 = scmp.ne.s32.totalorder %s68, %s84
    %p86 = scmp.eq.s32.totalorder %s18, 0
    %p87 = por %p85, %p86
    %s89 = sadd.s32 %s88, 1
    %p92 = scmp.eq.s32.totalorder %s12, 1
    %p93 = scmp.ne.s32.totalorder %s88, %s90
    %p94 = scmp.eq.s32.totalorder %s12, 0
    %p95 = por %p93, %p94
    %p96 = scmp.ne.s32.totalorder %s88, %s90
    %p97 = scmp.eq.s32.totalorder %s17, 1
    %p98 = por %p96, %p97
    %p99 = scmp.ne.s32.totalorder %s90, %s91
    %p100 = scmp.eq.s32.totalorder %s17, 0
    %p101 = por %p99, %p100
    %p102 = scmp.ne.s32.totalorder %s90, %s91
    %p103 = scmp.eq.s32.totalorder %s18, 1
    %p104 = por %p102, %p103
    %p106 = scmp.ne.s32.totalorder %s91, %s105
    %p107 = scmp.eq.s32.totalorder %s18, 0
    %p108 = por %p106, %p107
    %s110 = sadd.s32 %s109, 1
    %p113 = scmp.eq.s32.totalorder %s12, 1
    %p114 = scmp.ne.s32.totalorder %s109, %s111
    %p115 = scmp.eq.s32.totalorder %s12, 0
    %p116 = por %p114, %p115
    %p117 = scmp.ne.s32.totalorder %s109, %s111
    %p118 = scmp.eq.s32.totalorder %s17, 1
    %p119 = por %p117, %p118
    %p120 = scmp.ne.s32.totalorder %s111, %s112
    %p121 = scmp.eq.s32.totalorder %s17, 0
    %p122 = por %p120, %p121
    %p123 = scmp.ne.s32.totalorder %s111, %s112
    %p124 = scmp.eq.s32.totalorder %s18, 1
    %p125 = por %p123, %p124
    %p127 = scmp.ne.s32.totalorder %s112, %s126
    %p128 = scmp.eq.s32.totalorder %s18, 0
    %p129 = por %p127, %p128
    %s131 = sadd.s32 %s130, 1
    %p134 = scmp.eq.s32.totalorder %s12, 1
    %p135 = scmp.ne.s32.totalorder %s130, %s132
    %p136 = scmp.eq.s32.totalorder %s12, 0
    %p137 = por %p135, %p136
    %p138 = scmp.ne.s32.totalorder %s130, %s132
    %p139 = scmp.eq.s32.totalorder %s17, 1
    %p140 = por %p138, %p139
    %p141 = scmp.ne.s32.totalorder %s132, %s133
    %p142 = scmp.eq.s32.totalorder %s17, 0
    %p143 = por %p141, %p142
    %p144 = scmp.ne.s32.totalorder %s132, %s133
    %p145 = scmp.eq.s32.totalorder %s18, 1
    %p146 = por %p144, %p145
    %p148 = scmp.ne.s32.totalorder %s133, %s147
    %p149 = scmp.eq.s32.totalorder %s18, 0
    %p150 = por %p148, %p149
    %s151 = ssub.s32 %s19, %s31
    %s152 = ssub.s32 %s20, %s27
    %s153 = sor.u32 %s151, %s152
    %p154 = scmp.eq.s32.totalorder %s153, 0
    %s156 = sadd.s32 %s155, 1
    %s157 = scalar_select %p154, %s155, %s156
    %p160 = pneg %p154
    %p161 = scmp.eq.s32.totalorder %s12, 1
    %p162 = por %p160, %p161
    %p163 = scmp.ne.s32.totalorder %s155, %s158
    %p164 = scmp.eq.s32.totalorder %s12, 0
    %p165 = por %p163, %p164
    %p166 = scmp.ne.s32.totalorder %s155, %s158
    %p167 = scmp.eq.s32.totalorder %s17, 1
    %p168 = por %p166, %p167
    %p169 = scmp.ne.s32.totalorder %s158, %s159
    %p170 = scmp.eq.s32.totalorder %s17, 0
    %p171 = por %p169, %p170
    %p172 = scmp.ne.s32.totalorder %s158, %s159
    %p173 = scmp.eq.s32.totalorder %s18, 1
    %p174 = por %p172, %p173
    %p176 = scmp.ne.s32.totalorder %s159, %s175
    %p177 = scmp.eq.s32.totalorder %s18, 0
    %p178 = por %p176, %p177
    %p179 = scmp.le.s32.totalorder 1, %s12
    %p180 = scmp.lt.s32.totalorder %s12, 3
    %p181 = pnand %p179, %p180
    %p182 = pneg %p181
    // Predicated region
    $region9: #{_lambda_.1} parent=5 // pred_check
      _
    $region10: #{_lambda_.1} parent=5 // pred_check_branch
      %184 = sbr.rel (%p181) target = $region12
    $region11: #{_lambda_.1} parent=5 // pred_region
      %s185 = ssub.s32 %s12, 1
      // Predicated region
      $region13: #{_lambda_.1} parent=11 // pred_check
        %p186 = pneg %p101
      $region14: #{_lambda_.1} parent=11 // pred_check_branch
        %188 = sbr.rel (%p186) target = $region16
      $region15: #{_lambda_.1} parent=11 // pred_region
        _
      $region16: #{_lambda_.1} parent=11 // pred_fallthru
        _
      // Predicated region
      $region17: #{_lambda_.1} parent=11 // pred_check
        %p189 = pneg %p122
      $region18: #{_lambda_.1} parent=11 // pred_check_branch
        %191 = sbr.rel (%p189) target = $region20
      $region19: #{_lambda_.1} parent=11 // pred_region
        _
      $region20: #{_lambda_.1} parent=11 // pred_fallthru
        _
      // Predicated region
      $region21: #{_lambda_.1} parent=11 // pred_check
        %p192 = pneg %p143
      $region22: #{_lambda_.1} parent=11 // pred_check_branch
        %194 = sbr.rel (%p192) target = $region24
      $region23: #{_lambda_.1} parent=11 // pred_region
        _
      $region24: #{_lambda_.1} parent=11 // pred_fallthru
        _
    $region12: #{_lambda_.1} parent=5 // pred_fallthru
      _
    %p195 = scmp.lt.s32.totalorder %s12, 2
    // Predicated region
    $region25: #{_lambda_.1} parent=5 // pred_check
      %p196 = pneg %p195
    $region26: #{_lambda_.1} parent=5 // pred_check_branch
      %198 = sbr.rel (%p196) target = $region28
    $region27: #{_lambda_.1} parent=5 // pred_region
      // Predicated region
      $region29: #{_lambda_.1} parent=27 // pred_check
        %p199 = pneg %p46
      $region30: #{_lambda_.1} parent=27 // pred_check_branch
        %201 = sbr.rel (%p199) target = $region32
      $region31: #{_lambda_.1} parent=27 // pred_region
        %s202 = smul.u32 2, %s20
        %p203 = scmp.lt.s32.totalorder %s19, 1
        %s204 = scalar_select %p203, %s19, 1
        %p205 = scmp.lt.s32.totalorder %s202, 1
        %s206 = scalar_select %p205, %s202, 1
        %s207 = smul.addr %s204, 32
        %s208 = sadd.s32 %s206, %s207
        %s209 = smul.addr %s208, 8
        %s210 = scalar_lea.vmem %s0, %s209
        %s211 = smul.u32 2, %s20
      $region32: #{_lambda_.1} parent=27 // pred_fallthru
        _
      // Predicated region
      $region33: #{_lambda_.1} parent=27 // pred_check
        %p212 = pneg %p74
      $region34: #{_lambda_.1} parent=27 // pred_check_branch
        %214 = sbr.rel (%p212) target = $region36
      $region35: #{_lambda_.1} parent=27 // pred_region
        %s215 = smul.u32 2, %s20
        %p216 = scmp.lt.s32.totalorder %s19, 1
        %s217 = scalar_select %p216, %s19, 1
        %p218 = scmp.lt.s32.totalorder %s215, 1
        %s219 = scalar_select %p218, %s215, 1
        %s220 = smul.addr %s217, 32
        %s221 = sadd.s32 %s219, %s220
        %s222 = smul.addr %s221, 8
        %s223 = scalar_lea.vmem %s1, %s222
        %s224 = smul.u32 2, %s20
      $region36: #{_lambda_.1} parent=27 // pred_fallthru
        _
    $region28: #{_lambda_.1} parent=5 // pred_fallthru
      _
    %p225 = scmp.le.s32.totalorder 1, %s12
    %p226 = scmp.lt.s32.totalorder %s12, 3
    %p227 = pnand %p225, %p226
    %p228 = pneg %p227
    // Predicated region
    $region37: #{_lambda_.1} parent=5 // pred_check
      _
    $region38: #{_lambda_.1} parent=5 // pred_check_branch
      %230 = sbr.rel (%p227) target = $region40
    $region39: #{_lambda_.1} parent=5 // pred_region
      %s231 = ssub.s32 %s12, 1
      %s232 = smul.u32 2, %s22
      %p233 = scmp.lt.s32.totalorder %s21, 1
      %s234 = scalar_select %p233, %s21, 1
      %p235 = scmp.lt.s32.totalorder %s232, 1
      %s236 = scalar_select %p235, %s232, 1
      %s237 = smul.addr %s234, 32
      %s238 = sadd.s32 %s236, %s237
      %s239 = smul.addr %s238, 8
      %s240 = scalar_lea.vmem %s0, %s239
      %p241 = pneg %p52
      %p242 = pneg %p49
      %s243 = smul.u32 2, %s22
      %p244 = scmp.lt.s32.totalorder %s21, 1
      %s245 = scalar_select %p244, %s21, 1
      %p246 = scmp.lt.s32.totalorder %s243, 1
      %s247 = scalar_select %p246, %s243, 1
      %s248 = smul.addr %s245, 32
      %s249 = sadd.s32 %s247, %s248
      %s250 = smul.addr %s249, 8
      %s251 = scalar_lea.vmem %s1, %s250
      %p252 = pneg %p80
      %p253 = pneg %p77
      %p254 = pneg %p101
      %p255 = pneg %p98
      %p256 = pneg %p122
      %p257 = pneg %p119
      %p258 = pneg %p143
      %p259 = pneg %p140
      %p260 = pneg %p171
      %p261 = pneg %p168
      %s262 = smul.u32 2, %s22
      %p263 = scmp.lt.s32.totalorder %s21, 1
      %s264 = scalar_select %p263, %s21, 1
      %p265 = scmp.lt.s32.totalorder %s262, 1
      %s266 = scalar_select %p265, %s262, 1
      %s267 = smul.addr %s264, 2
      %s268 = sadd.s32 %s266, %s267
      %s269 = scalar_lea.vmem %s5, %s268
      %s270 = smul.u32 2, %s22
      %p271 = scmp.lt.s32.totalorder %s21, 1
      %s272 = scalar_select %p271, %s21, 1
      %p273 = scmp.lt.s32.totalorder %s270, 1
      %s274 = scalar_select %p273, %s270, 1
      %s275 = smul.addr %s272, 32
      %s276 = sadd.s32 %s274, %s275
      %s277 = smul.addr %s276, 8
      %s278 = scalar_lea.vmem %s0, %s277
      %s279 = smul.u32 2, %s22
      %s280 = smul.u32 2, %s22
      %p281 = scmp.lt.s32.totalorder %s21, 1
      %s282 = scalar_select %p281, %s21, 1
      %p283 = scmp.lt.s32.totalorder %s280, 1
      %s284 = scalar_select %p283, %s280, 1
      %s285 = smul.addr %s282, 32
      %s286 = sadd.s32 %s284, %s285
      %s287 = smul.addr %s286, 8
      %s288 = scalar_lea.vmem %s1, %s287
      %s289 = smul.u32 2, %s22
      %s290 = smul.u32 2, %s22
      %p291 = scmp.lt.s32.totalorder %s21, 1
      %s292 = scalar_select %p291, %s21, 1
      %p293 = scmp.lt.s32.totalorder %s290, 1
      %s294 = scalar_select %p293, %s290, 1
      %s295 = smul.addr %s292, 2
      %s296 = sadd.s32 %s294, %s295
      %s297 = scalar_lea.vmem %s5, %s296
      %s298 = smul.u32 2, %s22
      %v299 = vld [vmem:[%s2] sm:$0x1]
      %v300 = vld [vmem:[%s278] sm:$0xff]
      %v301 = vld [vmem:[%s278 + $0x8] sm:$0xff]
      %v302 = vld [vmem:[%s278 + $0x10] sm:$0xff]
      %v303 = vld [vmem:[%s278 + $0x18] sm:$0xff]
      %v304 = vld [vmem:[%s278 + $0x20] sm:$0xff]
      %v305 = vld [vmem:[%s278 + $0x28] sm:$0xff]
      %v306 = vld [vmem:[%s278 + $0x30] sm:$0xff]
      %v307 = vld [vmem:[%s278 + $0x38] sm:$0xff]
      %v308 = vld [vmem:[%s278 + $0x40] sm:$0xff]
      %v309 = vld [vmem:[%s278 + $0x48] sm:$0xff]
      %v310 = vld [vmem:[%s278 + $0x50] sm:$0xff]
      %v311 = vld [vmem:[%s278 + $0x58] sm:$0xff]
      %v312 = vld [vmem:[%s278 + $0x60] sm:$0xff]
      %v313 = vld [vmem:[%s278 + $0x68] sm:$0xff]
      %v314 = vld [vmem:[%s278 + $0x70] sm:$0xff]
      %v315 = vld [vmem:[%s278 + $0x78] sm:$0xff]
      %v316 = vld [vmem:[%s278 + $0x80] sm:$0xff]
      %v317 = vld [vmem:[%s278 + $0x88] sm:$0xff]
      %v318 = vld [vmem:[%s278 + $0x90] sm:$0xff]
      %v319 = vld [vmem:[%s278 + $0x98] sm:$0xff]
      %v320 = vld [vmem:[%s278 + $0xa0] sm:$0xff]
      %v321 = vld [vmem:[%s278 + $0xa8] sm:$0xff]
      %v322 = vld [vmem:[%s278 + $0xb0] sm:$0xff]
      %v323 = vld [vmem:[%s278 + $0xb8] sm:$0xff]
      %v324 = vld [vmem:[%s278 + $0xc0] sm:$0xff]
      %v325 = vld [vmem:[%s278 + $0xc8] sm:$0xff]
      %v326 = vld [vmem:[%s278 + $0xd0] sm:$0xff]
      %v327 = vld [vmem:[%s278 + $0xd8] sm:$0xff]
      %v328 = vld [vmem:[%s278 + $0xe0] sm:$0xff]
      %v329 = vld [vmem:[%s278 + $0xe8] sm:$0xff]
      %v330 = vld [vmem:[%s278 + $0xf0] sm:$0xff]
      %v331 = vld [vmem:[%s278 + $0xf8] sm:$0xff]
      %v332 = vld [vmem:[%s3] sm:$0x1]
      %v333 = vld [vmem:[%s288] sm:$0xff]
      %v334 = vld [vmem:[%s288 + $0x8] sm:$0xff]
      %v335 = vld [vmem:[%s288 + $0x10] sm:$0xff]
      %v336 = vld [vmem:[%s288 + $0x18] sm:$0xff]
      %v337 = vld [vmem:[%s288 + $0x20] sm:$0xff]
      %v338 = vld [vmem:[%s288 + $0x28] sm:$0xff]
      %v339 = vld [vmem:[%s288 + $0x30] sm:$0xff]
      %v340 = vld [vmem:[%s288 + $0x38] sm:$0xff]
      %v341 = vld [vmem:[%s288 + $0x40] sm:$0xff]
      %v342 = vld [vmem:[%s288 + $0x48] sm:$0xff]
      %v343 = vld [vmem:[%s288 + $0x50] sm:$0xff]
      %v344 = vld [vmem:[%s288 + $0x58] sm:$0xff]
      %v345 = vld [vmem:[%s288 + $0x60] sm:$0xff]
      %v346 = vld [vmem:[%s288 + $0x68] sm:$0xff]
      %v347 = vld [vmem:[%s288 + $0x70] sm:$0xff]
      %v348 = vld [vmem:[%s288 + $0x78] sm:$0xff]
      %v349 = vld [vmem:[%s288 + $0x80] sm:$0xff]
      %v350 = vld [vmem:[%s288 + $0x88] sm:$0xff]
      %v351 = vld [vmem:[%s288 + $0x90] sm:$0xff]
      %v352 = vld [vmem:[%s288 + $0x98] sm:$0xff]
      %v353 = vld [vmem:[%s288 + $0xa0] sm:$0xff]
      %v354 = vld [vmem:[%s288 + $0xa8] sm:$0xff]
      %v355 = vld [vmem:[%s288 + $0xb0] sm:$0xff]
      %v356 = vld [vmem:[%s288 + $0xb8] sm:$0xff]
      %v357 = vld [vmem:[%s288 + $0xc0] sm:$0xff]
      %v358 = vld [vmem:[%s288 + $0xc8] sm:$0xff]
      %v359 = vld [vmem:[%s288 + $0xd0] sm:$0xff]
      %v360 = vld [vmem:[%s288 + $0xd8] sm:$0xff]
      %v361 = vld [vmem:[%s288 + $0xe0] sm:$0xff]
      %v362 = vld [vmem:[%s288 + $0xe8] sm:$0xff]
      %v363 = vld [vmem:[%s288 + $0xf0] sm:$0xff]
      %v364 = vld [vmem:[%s288 + $0xf8] sm:$0xff]
      %365 = vmatpush.msra.mxu0 %v363
      %366 = vmatpush.msra.mxu0 %v361
      %367 = vmatpush.msra.mxu0 %v359
      %368 = vmatpush.msra.mxu0 %v357
      %369 = vmatpush.msra.mxu0 %v355
      %370 = vmatpush.msra.mxu0 %v353
      %371 = vmatpush.msra.mxu0 %v351
      %372 = vmatpush.msra.mxu0 %v349
      %373 = vmatpush.msra.mxu0 %v347
      %374 = vmatpush.msra.mxu0 %v345
      %375 = vmatpush.msra.mxu0 %v343
      %376 = vmatpush.msra.mxu0 %v341
      %377 = vmatpush.msra.mxu0 %v339
      %378 = vmatpush.msra.mxu0 %v337
      %379 = vmatpush.msra.mxu0 %v335
      %380 = vmatpush.msra.mxu0 %v333
      %381 = vmatmul.f32.gmra.mxu0 %v332
      %v382 = vpop.f32.mrf.mxu0
      %v383 = vadd.f32 0.0, %v382
      %384 = vdwg.mxu0
      %385 = vmatpush.msra.mxu0 %v364
      %386 = vmatpush.msra.mxu0 %v362
      %387 = vmatpush.msra.mxu0 %v360
      %388 = vmatpush.msra.mxu0 %v358
      %389 = vmatpush.msra.mxu0 %v356
      %390 = vmatpush.msra.mxu0 %v354
      %391 = vmatpush.msra.mxu0 %v352
      %392 = vmatpush.msra.mxu0 %v350
      %393 = vmatpush.msra.mxu0 %v348
      %394 = vmatpush.msra.mxu0 %v346
      %395 = vmatpush.msra.mxu0 %v344
      %396 = vmatpush.msra.mxu0 %v342
      %397 = vmatpush.msra.mxu0 %v340
      %398 = vmatpush.msra.mxu0 %v338
      %399 = vmatpush.msra.mxu0 %v336
      %400 = vmatpush.msra.mxu0 %v334
      %401 = vmatmul.f32.gmra.mxu0 %v332
      %v402 = vpop.f32.mrf.mxu0
      %v403 = vadd.f32 0.0, %v402
      %404 = vdwg.mxu0
      %405 = vmatpush.msra.mxu0 %v330
      %406 = vmatpush.msra.mxu0 %v328
      %407 = vmatpush.msra.mxu0 %v326
      %408 = vmatpush.msra.mxu0 %v324
      %409 = vmatpush.msra.mxu0 %v322
      %410 = vmatpush.msra.mxu0 %v320
      %411 = vmatpush.msra.mxu0 %v318
      %412 = vmatpush.msra.mxu0 %v316
      %413 = vmatpush.msra.mxu0 %v314
      %414 = vmatpush.msra.mxu0 %v312
      %415 = vmatpush.msra.mxu0 %v310
      %416 = vmatpush.msra.mxu0 %v308
      %417 = vmatpush.msra.mxu0 %v306
      %418 = vmatpush.msra.mxu0 %v304
      %419 = vmatpush.msra.mxu0 %v302
      %420 = vmatpush.msra.mxu0 %v300
      %421 = vmatmul.f32.gmra.mxu0 %v299
      %v422 = vpop.f32.mrf.mxu0
      %v423 = vadd.f32 %v383, %v422
      %424 = vdwg.mxu0
      %425 = vmatpush.msra.mxu0 %v331
      %426 = vmatpush.msra.mxu0 %v329
      %427 = vmatpush.msra.mxu0 %v327
      %428 = vmatpush.msra.mxu0 %v325
      %429 = vmatpush.msra.mxu0 %v323
      %430 = vmatpush.msra.mxu0 %v321
      %431 = vmatpush.msra.mxu0 %v319
      %432 = vmatpush.msra.mxu0 %v317
      %433 = vmatpush.msra.mxu0 %v315
      %434 = vmatpush.msra.mxu0 %v313
      %435 = vmatpush.msra.mxu0 %v311
      %436 = vmatpush.msra.mxu0 %v309
      %437 = vmatpush.msra.mxu0 %v307
      %438 = vmatpush.msra.mxu0 %v305
      %439 = vmatpush.msra.mxu0 %v303
      %440 = vmatpush.msra.mxu0 %v301
      %441 = vmatmul.f32.gmra.mxu0 %v299
      %v442 = vpop.f32.mrf.mxu0
      %v443 = vadd.f32 %v403, %v442
      %444 = vdwg.mxu0
      %s445 = sld [smem:[#allocation2]]
      %v446 = vstv %s445
      %v447 = vadd.f32 %v423, %v446
      %v448 = vadd.f32 %v443, %v446
      %v451 = vrot.slane %v448, 7
      %vm452 = vcmask 1040384
      %v453 = vsel %vm452, %v447, %v451
      %v455 = vlaneseq
      %vm456 = vcmp.ge.s32.totalorder %v455, 0
      %vm457 = vcmp.lt.s32.totalorder %v455, 256
      %vm458 = vmand %vm456, %vm457
      %459 = vst.msk [vmem:[%s297] sm:$0x3] %vm458, %v453
      %s460 = smul.u32 2, %s22
      %p461 = scmp.lt.s32.totalorder %s21, 1
      %s462 = scalar_select %p461, %s21, 1
      %p463 = scmp.lt.s32.totalorder %s460, 1
      %s464 = scalar_select %p463, %s460, 1
      %s465 = smul.addr %s462, 2
      %s466 = sadd.s32 %s464, %s465
      %s467 = scalar_lea.vmem %s5, %s466
      // Predicated region
      $region41: #{_lambda_.1} parent=39 // pred_check
        %p468 = pneg %p168
      $region42: #{_lambda_.1} parent=39 // pred_check_branch
        %470 = sbr.rel (%p468) target = $region44
      $region43: #{_lambda_.1} parent=39 // pred_region
        %s471 = smul.u32 2, %s22
      $region44: #{_lambda_.1} parent=39 // pred_fallthru
        _
    $region40: #{_lambda_.1} parent=5 // pred_fallthru
      _
    %p472 = scmp.le.s32.totalorder 2, %s12
    // Predicated region
    $region45: #{_lambda_.1} parent=5 // pred_check
      %p473 = pneg %p472
    $region46: #{_lambda_.1} parent=5 // pred_check_branch
      %475 = sbr.rel (%p473) target = $region48
    $region47: #{_lambda_.1} parent=5 // pred_region
      %s476 = ssub.s32 %s12, 2
      // Predicated region
      $region49: #{_lambda_.1} parent=47 // pred_check
        %p477 = pneg %p174
      $region50: #{_lambda_.1} parent=47 // pred_check_branch
        %479 = sbr.rel (%p477) target = $region52
      $region51: #{_lambda_.1} parent=47 // pred_region
        %s480 = smul.u32 2, %s24
        %p481 = scmp.lt.s32.totalorder %s23, 1
        %s482 = scalar_select %p481, %s23, 1
        %p483 = scmp.lt.s32.totalorder %s480, 1
        %s484 = scalar_select %p483, %s480, 1
        %s485 = smul.addr %s482, 2
        %s486 = sadd.s32 %s484, %s485
        %s487 = scalar_lea.vmem %s5, %s486
      $region52: #{_lambda_.1} parent=47 // pred_fallthru
        _
    $region48: #{_lambda_.1} parent=5 // pred_fallthru
      _
  $region6: #{_lambda_.1} parent=0 // loop_footer
    %s16 = sadd.s32 1, %s12
  $region7: #{_lambda_.1} parent=0 // loop_footer_branch
    %11 = sbr.rel target = $region3
  $region8: #{_lambda_.1} parent=0 // loop_exit
    _

</llo_original>
